<compile_context>
chip_gen: v6e
topology: v6e:2x2x1
jax: 0.10.0
libtpu: 0.0.40
codegen_flags: <defaults>
</compile_context>

<pallas_src>
import functools

import jax
import jax.numpy as jnp
import numpy as np
from jax import lax
from jax.experimental import pallas as pl
from jax.experimental.pallas import tpu as pltpu


# ----------------------------------------------------------------------------
# Pallas kernel: one invocation = encoder + full LSTM recurrence + decoder
# ----------------------------------------------------------------------------
def _lstm7_kernel(x_ref, wcomb_ref, bcomb_ref, whh_ref, wdec_ref, bdec_ref,
                  out_ref, *, seq, batch, hidden):
    four_h = 4 * hidden

    # Input->gate projection for ALL timesteps in a single MXU call:
    #   (S*B, F)bf16 @ (F, 4H)bf16 -> (S*B, 4H)f32,  bias broadcast added once.
    gates_x = (jnp.dot(x_ref[...], wcomb_ref[...],
                       preferred_element_type=jnp.float32)
               + bcomb_ref[...])                                   # (S*B, 4H) f32

    whh = whh_ref[...]                                             # (H, 4H) bf16

    # Lane mask selecting the g-gate columns (tanh) vs i/f/o (sigmoid).
    lane = lax.broadcasted_iota(jnp.int32, (batch, four_h), 1)
    is_g = (lane >= 2 * hidden) & (lane < 3 * hidden)

    h = jnp.zeros((batch, hidden), jnp.float32)
    c = jnp.zeros((batch, hidden), jnp.float32)

    # Short static trip count -> fully unrolled straight-line recurrence
    # (gives the scheduler cross-timestep visibility; slices are tile-aligned
    #  since batch is a multiple of 8 sublanes).
    for t in range(seq):
        gx = gates_x[t * batch:(t + 1) * batch, :]                 # (B, 4H)
        gates = gx + jnp.dot(h.astype(jnp.bfloat16), whh,
                             preferred_element_type=jnp.float32)   # (B, 4H) f32

        # Two full-width EUP passes + one select (PyTorch gate order i,f,g,o).
        sig = jax.nn.sigmoid(gates)
        tnh = jnp.tanh(gates)
        act = jnp.where(is_g, tnh, sig)

        i_g = act[:, 0 * hidden:1 * hidden]
        f_g = act[:, 1 * hidden:2 * hidden]
        g_g = act[:, 2 * hidden:3 * hidden]
        o_g = act[:, 3 * hidden:4 * hidden]

        c = f_g * c + i_g * g_g
        h = o_g * jnp.tanh(c)

    # Decoder on h_n[-1]; output slab is lane-dense (OUT padded to 128).
    out_ref[...] = (jnp.dot(h.astype(jnp.bfloat16), wdec_ref[...],
                            preferred_element_type=jnp.float32)
                    + bdec_ref[...])


def _round_up(x, m):
    return ((x + m - 1) // m) * m


def lstm7_forward(x_bsf, params):
    """x_bsf: (batch, seq, feat) float32 -- same as the PyTorch batch_first input."""
    wenc, benc, wih, whh, bias, wdec, bdec = params
    B, S, F = x_bsf.shape
    H = whh.shape[0]                       # LSTM hidden size == height * width
    OUT = wdec.shape[1]

    B_pad = max(8, _round_up(B, 8))        # full sublane group
    OUT_pad = max(128, _round_up(OUT, 128))  # lane-dense output store

    # --- fuse the (linear) encoder into the input->gate projection -----------
    w_comb = wenc @ wih                    # (F, 4H)  f32 precompute
    b_comb = benc @ wih + bias             # (4H,)

    # --- time-major, batch padded, flattened to (S*B_pad, F) ----------------
    x_tmf = jnp.transpose(x_bsf, (1, 0, 2))                     # (S, B, F)
    x_tmf = jnp.pad(x_tmf, ((0, 0), (0, B_pad - B), (0, 0)))    # (S, B_pad, F)
    x_flat = x_tmf.reshape(S * B_pad, F).astype(jnp.bfloat16)

    wdec_p = jnp.pad(wdec, ((0, 0), (0, OUT_pad - OUT))).astype(jnp.bfloat16)
    bdec_p = jnp.pad(bdec, (0, OUT_pad - OUT)).reshape(1, OUT_pad)

    kernel = functools.partial(_lstm7_kernel, seq=S, batch=B_pad, hidden=H)

    out_pad = pl.pallas_call(
        kernel,
        out_shape=jax.ShapeDtypeStruct((B_pad, OUT_pad), jnp.float32),
        in_specs=[
            pl.BlockSpec(memory_space=pltpu.MemorySpace.VMEM),   # x (S*B_pad, F) bf16
            pl.BlockSpec(memory_space=pltpu.MemorySpace.VMEM),   # W_comb (F, 4H) bf16
            pl.BlockSpec(memory_space=pltpu.MemorySpace.VMEM),   # b_comb (1, 4H) f32
            pl.BlockSpec(memory_space=pltpu.MemorySpace.VMEM),   # W_hh^T (H, 4H) bf16
            pl.BlockSpec(memory_space=pltpu.MemorySpace.VMEM),   # W_dec (H, OUT_pad) bf16
            pl.BlockSpec(memory_space=pltpu.MemorySpace.VMEM),   # b_dec (1, OUT_pad) f32
        ],
        out_specs=pl.BlockSpec(memory_space=pltpu.MemorySpace.VMEM),
    )(x_flat, w_comb.astype(jnp.bfloat16), b_comb.reshape(1, 4 * H),
      whh.astype(jnp.bfloat16), wdec_p, bdec_p)

    return out_pad[:B, :OUT]


# ----------------------------------------------------------------------------
# Pure-JAX f32 reference (mirrors the PyTorch module semantics)
# ----------------------------------------------------------------------------
def lstm7_reference(x_bsf, params):
    wenc, benc, wih, whh, bias, wdec, bdec = params
    B = x_bsf.shape[0]
    H = whh.shape[0]
    enc = x_bsf @ wenc + benc                                    # (B, S, IS)

    def step(carry, x_t):
        h, c = carry
        gates = x_t @ wih + h @ whh + bias
        i_g = jax.nn.sigmoid(gates[:, 0 * H:1 * H])
        f_g = jax.nn.sigmoid(gates[:, 1 * H:2 * H])
        g_g = jnp.tanh(gates[:, 2 * H:3 * H])
        o_g = jax.nn.sigmoid(gates[:, 3 * H:4 * H])
        c_new = f_g * c + i_g * g_g
        h_new = o_g * jnp.tanh(c_new)
        return (h_new, c_new), None

    h0 = jnp.zeros((B, H), jnp.float32)
    c0 = jnp.zeros((B, H), jnp.float32)
    (h_n, _), _ = lax.scan(step, (h0, c0), jnp.transpose(enc, (1, 0, 2)))
    return h_n @ wdec + bdec


if __name__ == "__main__":
    # Small shapes consistent with the module:
    #   height=4, width=8 -> LSTM hidden/output_size = 32 (h_n is viewed as H*W)
    B, S, F = 4, 8, 16            # batch, seq, raw feature dim
    INPUT_SIZE = 32               # encoder output / LSTM input_size
    HEIGHT, WIDTH = 4, 8
    HIDDEN = HEIGHT * WIDTH       # LSTM hidden_size (output_size)
    OUT = F                       # decoder output dim

    key = jax.random.PRNGKey(0)
    ks = jax.random.split(key, 8)
    scale = 0.1
    x = jax.random.normal(ks[0], (B, S, F), jnp.float32)

    # TODO(synk): encoder/decoder are arbitrary modules passed into Lstm7's
    # __init__; they are modeled here as single Linear layers (the in-kernel
    # encoder fusion W_enc @ W_ih is exact only for a linear encoder).
    wenc = scale * jax.random.normal(ks[1], (F, INPUT_SIZE), jnp.float32)
    benc = scale * jax.random.normal(ks[2], (INPUT_SIZE,), jnp.float32)
    # LSTM weights (PyTorch weight_ih_l0 is (4H, IS); stored pre-transposed)
    wih = scale * jax.random.normal(ks[3], (INPUT_SIZE, 4 * HIDDEN), jnp.float32)
    whh = scale * jax.random.normal(ks[4], (HIDDEN, 4 * HIDDEN), jnp.float32)
    bias = scale * jax.random.normal(ks[5], (4 * HIDDEN,), jnp.float32)  # b_ih+b_hh
    wdec = scale * jax.random.normal(ks[6], (HIDDEN, OUT), jnp.float32)
    bdec = scale * jax.random.normal(ks[7], (OUT,), jnp.float32)

    params = (wenc, benc, wih, whh, bias, wdec, bdec)

    out = lstm7_forward(x, params)
    out = jax.block_until_ready(out)

    ref = lstm7_reference(x, params)
    # Tolerance accounts for bf16 matmul inputs (f32 accumulation / f32 state)
    # and the exact-but-reassociated encoder fusion inside the kernel.
    np.testing.assert_allclose(np.asarray(out), np.asarray(ref),
                               rtol=5e-2, atol=5e-3)
    print("KERNEL_OK")
</pallas_src>

<mosaic_0001>
module attributes {stable_mosaic.version = 11 : i64} {
  func.func @_lstm7_kernel(%arg0: memref<64x16xbf16, #tpu.memory_space<vmem>>, %arg1: memref<16x128xbf16, #tpu.memory_space<vmem>>, %arg2: memref<1x128xf32, #tpu.memory_space<vmem>>, %arg3: memref<32x128xbf16, #tpu.memory_space<vmem>>, %arg4: memref<32x128xbf16, #tpu.memory_space<vmem>>, %arg5: memref<1x128xf32, #tpu.memory_space<vmem>>, %arg6: memref<8x128xf32, #tpu.memory_space<vmem>>) attributes {dimension_semantics = [], scalar_prefetch = 0 : i64, scratch_operands = 0 : i64, tpu.core_type = #tpu.core_type<tc>} {
    %c0 = arith.constant 0 : index
    %c0_0 = arith.constant 0 : index
    %0 = vector.load %arg0[%c0, %c0_0] : memref<64x16xbf16, #tpu.memory_space<vmem>>, vector<64x16xbf16>
    %c0_1 = arith.constant 0 : index
    %c0_2 = arith.constant 0 : index
    %1 = vector.load %arg1[%c0_1, %c0_2] : memref<16x128xbf16, #tpu.memory_space<vmem>>, vector<16x128xbf16>
    %cst = arith.constant dense<0.000000e+00> : vector<64x128xf32>
    %2 = tpu.matmul %0, %1, %cst {dimension_numbers = #tpu.dot_dimension_numbers<[1], [0], [0], [1], [0, 0, 1, 1], [], []>} : vector<64x16xbf16>, vector<16x128xbf16>, vector<64x128xf32> -> vector<64x128xf32>
    %c0_3 = arith.constant 0 : index
    %c0_4 = arith.constant 0 : index
    %3 = vector.load %arg2[%c0_3, %c0_4] : memref<1x128xf32, #tpu.memory_space<vmem>>, vector<1x128xf32>
    %4 = vector.broadcast %3 : vector<1x128xf32> to vector<64x128xf32>
    %5 = arith.addf %2, %4 : vector<64x128xf32>
    %c0_5 = arith.constant 0 : index
    %c0_6 = arith.constant 0 : index
    %6 = vector.load %arg3[%c0_5, %c0_6] : memref<32x128xbf16, #tpu.memory_space<vmem>>, vector<32x128xbf16>
    %7 = tpu.iota {dimensions = array<i32: 1>} : vector<8x128xi32>
    %c64_i32 = arith.constant 64 : i32
    %8 = vector.broadcast %c64_i32 : i32 to vector<8x128xi32>
    %9 = arith.cmpi sge, %7, %8 : vector<8x128xi32>
    %c96_i32 = arith.constant 96 : i32
    %10 = vector.broadcast %c96_i32 : i32 to vector<8x128xi32>
    %11 = arith.cmpi slt, %7, %10 : vector<8x128xi32>
    %12 = arith.andi %9, %11 : vector<8x128xi1>
    %cst_7 = arith.constant 0.000000e+00 : f32
    %13 = vector.broadcast %cst_7 : f32 to vector<8x32xf32>
    %cst_8 = arith.constant 0.000000e+00 : f32
    %14 = vector.broadcast %cst_8 : f32 to vector<8x32xf32>
    %15 = vector.extract_strided_slice %5 {offsets = [0, 0], sizes = [8, 128], strides = [1, 1]} : vector<64x128xf32> to vector<8x128xf32>
    %16 = arith.truncf %13 : vector<8x32xf32> to vector<8x32xbf16>
    %cst_9 = arith.constant dense<0.000000e+00> : vector<8x128xf32>
    %17 = tpu.matmul %16, %6, %cst_9 {dimension_numbers = #tpu.dot_dimension_numbers<[1], [0], [0], [1], [0, 0, 1, 1], [], []>} : vector<8x32xbf16>, vector<32x128xbf16>, vector<8x128xf32> -> vector<8x128xf32>
    %18 = arith.addf %15, %17 : vector<8x128xf32>
    %19 = arith.negf %18 : vector<8x128xf32>
    %20 = math.exp %19 : vector<8x128xf32>
    %cst_10 = arith.constant 1.000000e+00 : f32
    %21 = vector.broadcast %cst_10 : f32 to vector<8x128xf32>
    %22 = arith.addf %21, %20 : vector<8x128xf32>
    %23 = arith.divf %21, %22 : vector<8x128xf32>
    %24 = math.tanh %18 : vector<8x128xf32>
    %25 = arith.select %12, %24, %23 : vector<8x128xi1>, vector<8x128xf32>
    %26 = vector.extract_strided_slice %25 {offsets = [0, 0], sizes = [8, 32], strides = [1, 1]} : vector<8x128xf32> to vector<8x32xf32>
    %27 = vector.extract_strided_slice %25 {offsets = [0, 32], sizes = [8, 32], strides = [1, 1]} : vector<8x128xf32> to vector<8x32xf32>
    %28 = vector.extract_strided_slice %25 {offsets = [0, 64], sizes = [8, 32], strides = [1, 1]} : vector<8x128xf32> to vector<8x32xf32>
    %29 = vector.extract_strided_slice %25 {offsets = [0, 96], sizes = [8, 32], strides = [1, 1]} : vector<8x128xf32> to vector<8x32xf32>
    %30 = arith.mulf %27, %14 : vector<8x32xf32>
    %31 = arith.mulf %26, %28 : vector<8x32xf32>
    %32 = arith.addf %30, %31 : vector<8x32xf32>
    %33 = math.tanh %32 : vector<8x32xf32>
    %34 = arith.mulf %29, %33 : vector<8x32xf32>
    %35 = vector.extract_strided_slice %5 {offsets = [8, 0], sizes = [8, 128], strides = [1, 1]} : vector<64x128xf32> to vector<8x128xf32>
    %36 = arith.truncf %34 : vector<8x32xf32> to vector<8x32xbf16>
    %cst_11 = arith.constant dense<0.000000e+00> : vector<8x128xf32>
    %37 = tpu.matmul %36, %6, %cst_11 {dimension_numbers = #tpu.dot_dimension_numbers<[1], [0], [0], [1], [0, 0, 1, 1], [], []>} : vector<8x32xbf16>, vector<32x128xbf16>, vector<8x128xf32> -> vector<8x128xf32>
    %38 = arith.addf %35, %37 : vector<8x128xf32>
    %39 = arith.negf %38 : vector<8x128xf32>
    %40 = math.exp %39 : vector<8x128xf32>
    %cst_12 = arith.constant 1.000000e+00 : f32
    %41 = vector.broadcast %cst_12 : f32 to vector<8x128xf32>
    %42 = arith.addf %41, %40 : vector<8x128xf32>
    %43 = arith.divf %41, %42 : vector<8x128xf32>
    %44 = math.tanh %38 : vector<8x128xf32>
    %45 = arith.select %12, %44, %43 : vector<8x128xi1>, vector<8x128xf32>
    %46 = vector.extract_strided_slice %45 {offsets = [0, 0], sizes = [8, 32], strides = [1, 1]} : vector<8x128xf32> to vector<8x32xf32>
    %47 = vector.extract_strided_slice %45 {offsets = [0, 32], sizes = [8, 32], strides = [1, 1]} : vector<8x128xf32> to vector<8x32xf32>
    %48 = vector.extract_strided_slice %45 {offsets = [0, 64], sizes = [8, 32], strides = [1, 1]} : vector<8x128xf32> to vector<8x32xf32>
    %49 = vector.extract_strided_slice %45 {offsets = [0, 96], sizes = [8, 32], strides = [1, 1]} : vector<8x128xf32> to vector<8x32xf32>
    %50 = arith.mulf %47, %32 : vector<8x32xf32>
    %51 = arith.mulf %46, %48 : vector<8x32xf32>
    %52 = arith.addf %50, %51 : vector<8x32xf32>
    %53 = math.tanh %52 : vector<8x32xf32>
    %54 = arith.mulf %49, %53 : vector<8x32xf32>
    %55 = vector.extract_strided_slice %5 {offsets = [16, 0], sizes = [8, 128], strides = [1, 1]} : vector<64x128xf32> to vector<8x128xf32>
    %56 = arith.truncf %54 : vector<8x32xf32> to vector<8x32xbf16>
    %cst_13 = arith.constant dense<0.000000e+00> : vector<8x128xf32>
    %57 = tpu.matmul %56, %6, %cst_13 {dimension_numbers = #tpu.dot_dimension_numbers<[1], [0], [0], [1], [0, 0, 1, 1], [], []>} : vector<8x32xbf16>, vector<32x128xbf16>, vector<8x128xf32> -> vector<8x128xf32>
    %58 = arith.addf %55, %57 : vector<8x128xf32>
    %59 = arith.negf %58 : vector<8x128xf32>
    %60 = math.exp %59 : vector<8x128xf32>
    %cst_14 = arith.constant 1.000000e+00 : f32
    %61 = vector.broadcast %cst_14 : f32 to vector<8x128xf32>
    %62 = arith.addf %61, %60 : vector<8x128xf32>
    %63 = arith.divf %61, %62 : vector<8x128xf32>
    %64 = math.tanh %58 : vector<8x128xf32>
    %65 = arith.select %12, %64, %63 : vector<8x128xi1>, vector<8x128xf32>
    %66 = vector.extract_strided_slice %65 {offsets = [0, 0], sizes = [8, 32], strides = [1, 1]} : vector<8x128xf32> to vector<8x32xf32>
    %67 = vector.extract_strided_slice %65 {offsets = [0, 32], sizes = [8, 32], strides = [1, 1]} : vector<8x128xf32> to vector<8x32xf32>
    %68 = vector.extract_strided_slice %65 {offsets = [0, 64], sizes = [8, 32], strides = [1, 1]} : vector<8x128xf32> to vector<8x32xf32>
    %69 = vector.extract_strided_slice %65 {offsets = [0, 96], sizes = [8, 32], strides = [1, 1]} : vector<8x128xf32> to vector<8x32xf32>
    %70 = arith.mulf %67, %52 : vector<8x32xf32>
    %71 = arith.mulf %66, %68 : vector<8x32xf32>
    %72 = arith.addf %70, %71 : vector<8x32xf32>
    %73 = math.tanh %72 : vector<8x32xf32>
    %74 = arith.mulf %69, %73 : vector<8x32xf32>
    %75 = vector.extract_strided_slice %5 {offsets = [24, 0], sizes = [8, 128], strides = [1, 1]} : vector<64x128xf32> to vector<8x128xf32>
    %76 = arith.truncf %74 : vector<8x32xf32> to vector<8x32xbf16>
    %cst_15 = arith.constant dense<0.000000e+00> : vector<8x128xf32>
    %77 = tpu.matmul %76, %6, %cst_15 {dimension_numbers = #tpu.dot_dimension_numbers<[1], [0], [0], [1], [0, 0, 1, 1], [], []>} : vector<8x32xbf16>, vector<32x128xbf16>, vector<8x128xf32> -> vector<8x128xf32>
    %78 = arith.addf %75, %77 : vector<8x128xf32>
    %79 = arith.negf %78 : vector<8x128xf32>
    %80 = math.exp %79 : vector<8x128xf32>
    %cst_16 = arith.constant 1.000000e+00 : f32
    %81 = vector.broadcast %cst_16 : f32 to vector<8x128xf32>
    %82 = arith.addf %81, %80 : vector<8x128xf32>
    %83 = arith.divf %81, %82 : vector<8x128xf32>
    %84 = math.tanh %78 : vector<8x128xf32>
    %85 = arith.select %12, %84, %83 : vector<8x128xi1>, vector<8x128xf32>
    %86 = vector.extract_strided_slice %85 {offsets = [0, 0], sizes = [8, 32], strides = [1, 1]} : vector<8x128xf32> to vector<8x32xf32>
    %87 = vector.extract_strided_slice %85 {offsets = [0, 32], sizes = [8, 32], strides = [1, 1]} : vector<8x128xf32> to vector<8x32xf32>
    %88 = vector.extract_strided_slice %85 {offsets = [0, 64], sizes = [8, 32], strides = [1, 1]} : vector<8x128xf32> to vector<8x32xf32>
    %89 = vector.extract_strided_slice %85 {offsets = [0, 96], sizes = [8, 32], strides = [1, 1]} : vector<8x128xf32> to vector<8x32xf32>
    %90 = arith.mulf %87, %72 : vector<8x32xf32>
    %91 = arith.mulf %86, %88 : vector<8x32xf32>
    %92 = arith.addf %90, %91 : vector<8x32xf32>
    %93 = math.tanh %92 : vector<8x32xf32>
    %94 = arith.mulf %89, %93 : vector<8x32xf32>
    %95 = vector.extract_strided_slice %5 {offsets = [32, 0], sizes = [8, 128], strides = [1, 1]} : vector<64x128xf32> to vector<8x128xf32>
    %96 = arith.truncf %94 : vector<8x32xf32> to vector<8x32xbf16>
    %cst_17 = arith.constant dense<0.000000e+00> : vector<8x128xf32>
    %97 = tpu.matmul %96, %6, %cst_17 {dimension_numbers = #tpu.dot_dimension_numbers<[1], [0], [0], [1], [0, 0, 1, 1], [], []>} : vector<8x32xbf16>, vector<32x128xbf16>, vector<8x128xf32> -> vector<8x128xf32>
    %98 = arith.addf %95, %97 : vector<8x128xf32>
    %99 = arith.negf %98 : vector<8x128xf32>
    %100 = math.exp %99 : vector<8x128xf32>
    %cst_18 = arith.constant 1.000000e+00 : f32
    %101 = vector.broadcast %cst_18 : f32 to vector<8x128xf32>
    %102 = arith.addf %101, %100 : vector<8x128xf32>
    %103 = arith.divf %101, %102 : vector<8x128xf32>
    %104 = math.tanh %98 : vector<8x128xf32>
    %105 = arith.select %12, %104, %103 : vector<8x128xi1>, vector<8x128xf32>
    %106 = vector.extract_strided_slice %105 {offsets = [0, 0], sizes = [8, 32], strides = [1, 1]} : vector<8x128xf32> to vector<8x32xf32>
    %107 = vector.extract_strided_slice %105 {offsets = [0, 32], sizes = [8, 32], strides = [1, 1]} : vector<8x128xf32> to vector<8x32xf32>
    %108 = vector.extract_strided_slice %105 {offsets = [0, 64], sizes = [8, 32], strides = [1, 1]} : vector<8x128xf32> to vector<8x32xf32>
    %109 = vector.extract_strided_slice %105 {offsets = [0, 96], sizes = [8, 32], strides = [1, 1]} : vector<8x128xf32> to vector<8x32xf32>
    %110 = arith.mulf %107, %92 : vector<8x32xf32>
    %111 = arith.mulf %106, %108 : vector<8x32xf32>
    %112 = arith.addf %110, %111 : vector<8x32xf32>
    %113 = math.tanh %112 : vector<8x32xf32>
    %114 = arith.mulf %109, %113 : vector<8x32xf32>
    %115 = vector.extract_strided_slice %5 {offsets = [40, 0], sizes = [8, 128], strides = [1, 1]} : vector<64x128xf32> to vector<8x128xf32>
    %116 = arith.truncf %114 : vector<8x32xf32> to vector<8x32xbf16>
    %cst_19 = arith.constant dense<0.000000e+00> : vector<8x128xf32>
    %117 = tpu.matmul %116, %6, %cst_19 {dimension_numbers = #tpu.dot_dimension_numbers<[1], [0], [0], [1], [0, 0, 1, 1], [], []>} : vector<8x32xbf16>, vector<32x128xbf16>, vector<8x128xf32> -> vector<8x128xf32>
    %118 = arith.addf %115, %117 : vector<8x128xf32>
    %119 = arith.negf %118 : vector<8x128xf32>
    %120 = math.exp %119 : vector<8x128xf32>
    %cst_20 = arith.constant 1.000000e+00 : f32
    %121 = vector.broadcast %cst_20 : f32 to vector<8x128xf32>
    %122 = arith.addf %121, %120 : vector<8x128xf32>
    %123 = arith.divf %121, %122 : vector<8x128xf32>
    %124 = math.tanh %118 : vector<8x128xf32>
    %125 = arith.select %12, %124, %123 : vector<8x128xi1>, vector<8x128xf32>
    %126 = vector.extract_strided_slice %125 {offsets = [0, 0], sizes = [8, 32], strides = [1, 1]} : vector<8x128xf32> to vector<8x32xf32>
    %127 = vector.extract_strided_slice %125 {offsets = [0, 32], sizes = [8, 32], strides = [1, 1]} : vector<8x128xf32> to vector<8x32xf32>
    %128 = vector.extract_strided_slice %125 {offsets = [0, 64], sizes = [8, 32], strides = [1, 1]} : vector<8x128xf32> to vector<8x32xf32>
    %129 = vector.extract_strided_slice %125 {offsets = [0, 96], sizes = [8, 32], strides = [1, 1]} : vector<8x128xf32> to vector<8x32xf32>
    %130 = arith.mulf %127, %112 : vector<8x32xf32>
    %131 = arith.mulf %126, %128 : vector<8x32xf32>
    %132 = arith.addf %130, %131 : vector<8x32xf32>
    %133 = math.tanh %132 : vector<8x32xf32>
    %134 = arith.mulf %129, %133 : vector<8x32xf32>
    %135 = vector.extract_strided_slice %5 {offsets = [48, 0], sizes = [8, 128], strides = [1, 1]} : vector<64x128xf32> to vector<8x128xf32>
    %136 = arith.truncf %134 : vector<8x32xf32> to vector<8x32xbf16>
    %cst_21 = arith.constant dense<0.000000e+00> : vector<8x128xf32>
    %137 = tpu.matmul %136, %6, %cst_21 {dimension_numbers = #tpu.dot_dimension_numbers<[1], [0], [0], [1], [0, 0, 1, 1], [], []>} : vector<8x32xbf16>, vector<32x128xbf16>, vector<8x128xf32> -> vector<8x128xf32>
    %138 = arith.addf %135, %137 : vector<8x128xf32>
    %139 = arith.negf %138 : vector<8x128xf32>
    %140 = math.exp %139 : vector<8x128xf32>
    %cst_22 = arith.constant 1.000000e+00 : f32
    %141 = vector.broadcast %cst_22 : f32 to vector<8x128xf32>
    %142 = arith.addf %141, %140 : vector<8x128xf32>
    %143 = arith.divf %141, %142 : vector<8x128xf32>
    %144 = math.tanh %138 : vector<8x128xf32>
    %145 = arith.select %12, %144, %143 : vector<8x128xi1>, vector<8x128xf32>
    %146 = vector.extract_strided_slice %145 {offsets = [0, 0], sizes = [8, 32], strides = [1, 1]} : vector<8x128xf32> to vector<8x32xf32>
    %147 = vector.extract_strided_slice %145 {offsets = [0, 32], sizes = [8, 32], strides = [1, 1]} : vector<8x128xf32> to vector<8x32xf32>
    %148 = vector.extract_strided_slice %145 {offsets = [0, 64], sizes = [8, 32], strides = [1, 1]} : vector<8x128xf32> to vector<8x32xf32>
    %149 = vector.extract_strided_slice %145 {offsets = [0, 96], sizes = [8, 32], strides = [1, 1]} : vector<8x128xf32> to vector<8x32xf32>
    %150 = arith.mulf %147, %132 : vector<8x32xf32>
    %151 = arith.mulf %146, %148 : vector<8x32xf32>
    %152 = arith.addf %150, %151 : vector<8x32xf32>
    %153 = math.tanh %152 : vector<8x32xf32>
    %154 = arith.mulf %149, %153 : vector<8x32xf32>
    %155 = vector.extract_strided_slice %5 {offsets = [56, 0], sizes = [8, 128], strides = [1, 1]} : vector<64x128xf32> to vector<8x128xf32>
    %156 = arith.truncf %154 : vector<8x32xf32> to vector<8x32xbf16>
    %cst_23 = arith.constant dense<0.000000e+00> : vector<8x128xf32>
    %157 = tpu.matmul %156, %6, %cst_23 {dimension_numbers = #tpu.dot_dimension_numbers<[1], [0], [0], [1], [0, 0, 1, 1], [], []>} : vector<8x32xbf16>, vector<32x128xbf16>, vector<8x128xf32> -> vector<8x128xf32>
    %158 = arith.addf %155, %157 : vector<8x128xf32>
    %159 = arith.negf %158 : vector<8x128xf32>
    %160 = math.exp %159 : vector<8x128xf32>
    %cst_24 = arith.constant 1.000000e+00 : f32
    %161 = vector.broadcast %cst_24 : f32 to vector<8x128xf32>
    %162 = arith.addf %161, %160 : vector<8x128xf32>
    %163 = arith.divf %161, %162 : vector<8x128xf32>
    %164 = math.tanh %158 : vector<8x128xf32>
    %165 = arith.select %12, %164, %163 : vector<8x128xi1>, vector<8x128xf32>
    %166 = vector.extract_strided_slice %165 {offsets = [0, 0], sizes = [8, 32], strides = [1, 1]} : vector<8x128xf32> to vector<8x32xf32>
    %167 = vector.extract_strided_slice %165 {offsets = [0, 32], sizes = [8, 32], strides = [1, 1]} : vector<8x128xf32> to vector<8x32xf32>
    %168 = vector.extract_strided_slice %165 {offsets = [0, 64], sizes = [8, 32], strides = [1, 1]} : vector<8x128xf32> to vector<8x32xf32>
    %169 = vector.extract_strided_slice %165 {offsets = [0, 96], sizes = [8, 32], strides = [1, 1]} : vector<8x128xf32> to vector<8x32xf32>
    %170 = arith.mulf %167, %152 : vector<8x32xf32>
    %171 = arith.mulf %166, %168 : vector<8x32xf32>
    %172 = arith.addf %170, %171 : vector<8x32xf32>
    %173 = math.tanh %172 : vector<8x32xf32>
    %174 = arith.mulf %169, %173 : vector<8x32xf32>
    %175 = arith.truncf %174 : vector<8x32xf32> to vector<8x32xbf16>
    %c0_25 = arith.constant 0 : index
    %c0_26 = arith.constant 0 : index
    %176 = vector.load %arg4[%c0_25, %c0_26] : memref<32x128xbf16, #tpu.memory_space<vmem>>, vector<32x128xbf16>
    %cst_27 = arith.constant dense<0.000000e+00> : vector<8x128xf32>
    %177 = tpu.matmul %175, %176, %cst_27 {dimension_numbers = #tpu.dot_dimension_numbers<[1], [0], [0], [1], [0, 0, 1, 1], [], []>} : vector<8x32xbf16>, vector<32x128xbf16>, vector<8x128xf32> -> vector<8x128xf32>
    %c0_28 = arith.constant 0 : index
    %c0_29 = arith.constant 0 : index
    %178 = vector.load %arg5[%c0_28, %c0_29] : memref<1x128xf32, #tpu.memory_space<vmem>>, vector<1x128xf32>
    %179 = vector.broadcast %178 : vector<1x128xf32> to vector<8x128xf32>
    %180 = arith.addf %177, %179 : vector<8x128xf32>
    %c0_30 = arith.constant 0 : index
    %c0_31 = arith.constant 0 : index
    %181 = vector.load %arg6[%c0_30, %c0_31] : memref<8x128xf32, #tpu.memory_space<vmem>>, vector<8x128xf32>
    tpu.vector_store %arg6[%c0_30, %c0_31], %180 {strides = array<i32>} : memref<8x128xf32, #tpu.memory_space<vmem>>, vector<8x128xf32>,
    return
  }
}

</mosaic_0001>

<llo_original>
// kernel: tpu_custom_call.1
$region0: #{tpu_custom_call.1}
  #allocation0 [shape = 'u32[]', space=smem, size = 0x4, offset = 0x4, fixed_abs, tag = 'smem constant byte address 0x4 - core index']
  #allocation1 [shape = 'u32[144,128]{1,0:T(1,128)}', space=vmem, size = 0x12000, scoped, tag = 'internal scratch']
  %s0 = inlined_call_operand.vmem [shape: bf16[64,16], index: 0, kind: input, shape index: {}]
  %s1 = inlined_call_operand.vmem [shape: bf16[16,128], index: 1, kind: input, shape index: {}]
  %s2 = inlined_call_operand.vmem [shape: f32[1,128], index: 2, kind: input, shape index: {}]
  %s3 = inlined_call_operand.vmem [shape: bf16[32,128], index: 3, kind: input, shape index: {}]
  %s4 = inlined_call_operand.vmem [shape: bf16[32,128], index: 4, kind: input, shape index: {}]
  %s5 = inlined_call_operand.vmem [shape: f32[1,128], index: 5, kind: input, shape index: {}]
  %s6 = inlined_call_operand.hbm [shape: f32[8,128], index: 6, kind: output, shape index: {}]
  %s7 = sld [smem:[#allocation0]]
  $region34: #{tpu_custom_call.1} parent=0
    _
  %s9 = ssub.s32 1, %s7
  %s10 = scalar_select 0, %s9, %s7
  $region1: #{tpu_custom_call.1} parent=0
    #allocation2 [shape = 'u8[4096]{0}', space=vmem, size = 0x1000, scoped, tag = 'output window, operand 0, single buffered']
    #allocation3 [shape = 's32[1]{0}', space=sflag, size = 0x4, scoped, tag = 'scoped memory for tpu_custom_call.1']
    %11 = vsyncpa [#allocation3], 0
    // Predicated region
    $region2: #{tpu_custom_call.1} parent=1 // pred_check
      _
    $region3: #{tpu_custom_call.1} parent=1 // pred_check_branch
      %13 = sbr.rel (0) target = $region5
    $region4: #{tpu_custom_call.1} parent=1 // pred_region
      _
    $region5: #{tpu_custom_call.1} parent=1 // pred_fallthru
      _
    // Predicated region
    $region6: #{tpu_custom_call.1} parent=1 // pred_check
      _
    $region7: #{tpu_custom_call.1} parent=1 // pred_check_branch
      %15 = sbr.rel (0) target = $region9
    $region8: #{tpu_custom_call.1} parent=1 // pred_region
      _
    $region9: #{tpu_custom_call.1} parent=1 // pred_fallthru
      _
    // Predicated region
    $region10: #{tpu_custom_call.1} parent=1 // pred_check
      _
    $region11: #{tpu_custom_call.1} parent=1 // pred_check_branch
      %17 = sbr.rel (0) target = $region13
    $region12: #{tpu_custom_call.1} parent=1 // pred_region
      _
    $region13: #{tpu_custom_call.1} parent=1 // pred_fallthru
      _
    // Predicated region
    $region14: #{tpu_custom_call.1} parent=1 // pred_check
      _
    $region15: #{tpu_custom_call.1} parent=1 // pred_check_branch
      %19 = sbr.rel (0) target = $region17
    $region16: #{tpu_custom_call.1} parent=1 // pred_region
      _
    $region17: #{tpu_custom_call.1} parent=1 // pred_fallthru
      _
    // Predicated region
    $region18: #{tpu_custom_call.1} parent=1 // pred_check
      _
    $region19: #{tpu_custom_call.1} parent=1 // pred_check_branch
      %21 = sbr.rel (0) target = $region21
    $region20: #{tpu_custom_call.1} parent=1 // pred_region
      _
    $region21: #{tpu_custom_call.1} parent=1 // pred_fallthru
      _
    // Predicated region
    $region22: #{tpu_custom_call.1} parent=1 // pred_check
      _
    $region23: #{tpu_custom_call.1} parent=1 // pred_check_branch
      %23 = sbr.rel (0) target = $region25
    $region24: #{tpu_custom_call.1} parent=1 // pred_region
      _
    $region25: #{tpu_custom_call.1} parent=1 // pred_fallthru
      _
    %v25 = vld [vmem:[%s0] sm:$0xf]
    %v26 = vld [vmem:[%s0 + $0x4] sm:$0xf]
    %v27 = vld [vmem:[%s0 + $0x8] sm:$0xf]
    %v28 = vld [vmem:[%s0 + $0xc] sm:$0xf]
    %v29 = vld [vmem:[%s0 + $0x10] sm:$0xf]
    %v30 = vld [vmem:[%s0 + $0x14] sm:$0xf]
    %v31 = vld [vmem:[%s0 + $0x18] sm:$0xf]
    %v32 = vld [vmem:[%s0 + $0x1c] sm:$0xf]
    %v33 = vld [vmem:[%s1] sm:$0xf]
    %v34 = vld [vmem:[%s1 + $0x4] sm:$0xf]
    %v35 = vld [vmem:[%s2] sm:$0x1]
    %v37 = vlaneseq
    %v38 = vshrl.u32 %v37, 7
    %v39 = vsub.s32 0, %v38
    %v40 = vrot.slane %v35, %v39
    %v50 = vunpack.c.l.b16 %v25
    %v51 = vunpack.c.l.b16 %v26
    %v52 = vunpack.c.l.b16 %v27
    %v53 = vunpack.c.l.b16 %v28
    %v54 = vunpack.c.l.b16 %v29
    %v55 = vunpack.c.l.b16 %v30
    %v56 = vunpack.c.l.b16 %v31
    %v57 = vunpack.c.l.b16 %v32
    %v58 = vpack.c.b16 %v51, %v50
    %v59 = vpack.c.b16 %v53, %v52
    %v60 = vpack.c.b16 %v55, %v54
    %v61 = vpack.c.b16 %v57, %v56
    %v64 = vunpack.c.l.b16 %v33
    %v65 = vunpack.c.l.b16 %v34
    %v66 = vpack.c.b16 %v65, %v64
    %vm68 = vcmask 130048
    %v70 = vsel %vm68, %v58, 0
    %v73 = vsel %vm68, %v59, 0
    %v76 = vsel %vm68, %v60, 0
    %v79 = vsel %vm68, %v61, 0
    %81 = vmatprep.subr.bf16.mxu0 0
    %82 = vmatpush1.bf16.msra.mxu0 0
    %83 = vmatprep.subr.bf16.mxu0 0
    %84 = vmatpush1.bf16.msra.mxu0 0
    %85 = vmatprep.subr.bf16.mxu0 0
    %86 = vmatpush1.bf16.msra.mxu0 0
    %87 = vmatprep.subr.bf16.mxu0 0
    %88 = vmatpush1.bf16.msra.mxu0 0
    %89 = vmatprep.subr.bf16.mxu0 0
    %90 = vmatpush1.bf16.msra.mxu0 0
    %91 = vmatprep.subr.bf16.mxu0 0
    %92 = vmatpush1.bf16.msra.mxu0 0
    %93 = vmatprep.subr.bf16.mxu0 0
    %94 = vmatpush1.bf16.msra.mxu0 0
    %95 = vmatprep.subr.bf16.mxu0 0
    %96 = vmatpush1.bf16.msra.mxu0 %v66
    %97 = vmatprep.subr.bf16.mxu0 0
    %98 = vmatpush2.bf16.msra.mxu0 0
    %99 = vmatprep.subr.bf16.mxu0 0
    %100 = vmatpush2.bf16.msra.mxu0 0
    %101 = vmatprep.subr.bf16.mxu0 0
    %102 = vmatpush2.bf16.msra.mxu0 0
    %103 = vmatprep.subr.bf16.mxu0 0
    %104 = vmatpush2.bf16.msra.mxu0 0
    %105 = vmatprep.subr.bf16.mxu0 0
    %106 = vmatpush2.bf16.msra.mxu0 0
    %107 = vmatprep.subr.bf16.mxu0 0
    %108 = vmatpush2.bf16.msra.mxu0 0
    %109 = vmatprep.subr.bf16.mxu0 0
    %110 = vmatpush2.bf16.msra.mxu0 0
    %111 = vmatprep.subr.bf16.mxu0 0
    %112 = vmatpush2.bf16.msra.mxu0 0
    %113 = vmatprep.mubr.bf16.mxu0 0
    %114 = vmatmul.mubr.bf16.gmra.mxu0 %v70
    %v115 = vpop.f32.mrf.mxu0
    %v116 = vadd.f32 %v40, %v115
    %v117 = vpop.f32.mrf.mxu0
    %v118 = vpop.f32.mrf.mxu0
    %v119 = vadd.f32 %v40, %v118
    %v120 = vpop.f32.mrf.mxu0
    %121 = vmatprep.mubr.bf16.mxu0 0
    %122 = vmatmul.mubr.bf16.gmra.mxu0 %v73
    %v123 = vpop.f32.mrf.mxu0
    %v124 = vadd.f32 %v40, %v123
    %v125 = vpop.f32.mrf.mxu0
    %v126 = vpop.f32.mrf.mxu0
    %v127 = vadd.f32 %v40, %v126
    %v128 = vpop.f32.mrf.mxu0
    %129 = vmatprep.mubr.bf16.mxu0 0
    %130 = vmatmul.mubr.bf16.gmra.mxu0 %v76
    %v131 = vpop.f32.mrf.mxu0
    %v132 = vadd.f32 %v40, %v131
    %v133 = vpop.f32.mrf.mxu0
    %v134 = vpop.f32.mrf.mxu0
    %v135 = vadd.f32 %v40, %v134
    %v136 = vpop.f32.mrf.mxu0
    %137 = vmatprep.mubr.bf16.mxu0 0
    %138 = vmatmul.mubr.bf16.gmra.mxu0 %v79
    %v139 = vpop.f32.mrf.mxu0
    %v140 = vadd.f32 %v40, %v139
    %v141 = vpop.f32.mrf.mxu0
    %v142 = vpop.f32.mrf.mxu0
    %v143 = vadd.f32 %v40, %v142
    %v144 = vpop.f32.mrf.mxu0
    %145 = vdwg.mxu0
    %v146 = vld [vmem:[%s3] sm:$0xf]
    %v147 = vld [vmem:[%s3 + $0x4] sm:$0xf]
    %v148 = vld [vmem:[%s3 + $0x8] sm:$0xf]
    %v149 = vld [vmem:[%s3 + $0xc] sm:$0xf]
    %v150 = vlaneseq
    %v151 = vand.u32 %v150, 127
    %vm152 = vcmp.ge.s32.totalorder %v151, 64
    %vm153 = vcmp.lt.s32.totalorder %v151, 96
    %vm154 = vmand %vm152, %vm153
    %v159 = vunpack.c.l.b16 %v146
    %v160 = vunpack.c.l.b16 %v147
    %v161 = vunpack.c.l.b16 %v148
    %v162 = vunpack.c.l.b16 %v149
    %v163 = vpack.c.b16 %v160, %v159
    %v164 = vpack.c.b16 %v162, %v161
    %vm167 = vcmask 261120
    %v169 = vsel %vm167, 0, 0
    %171 = vmatprep.subr.bf16.mxu0 0
    %172 = vmatpush1.bf16.msra.mxu0 0
    %173 = vmatprep.subr.bf16.mxu0 0
    %174 = vmatpush1.bf16.msra.mxu0 0
    %175 = vmatprep.subr.bf16.mxu0 0
    %176 = vmatpush1.bf16.msra.mxu0 0
    %177 = vmatprep.subr.bf16.mxu0 0
    %178 = vmatpush1.bf16.msra.mxu0 0
    %179 = vmatprep.subr.bf16.mxu0 0
    %180 = vmatpush1.bf16.msra.mxu0 0
    %181 = vmatprep.subr.bf16.mxu0 0
    %182 = vmatpush1.bf16.msra.mxu0 0
    %183 = vmatprep.subr.bf16.mxu0 0
    %184 = vmatpush1.bf16.msra.mxu0 %v164
    %185 = vmatprep.subr.bf16.mxu0 0
    %186 = vmatpush1.bf16.msra.mxu0 %v163
    %187 = vmatprep.subr.bf16.mxu0 0
    %188 = vmatpush2.bf16.msra.mxu0 0
    %189 = vmatprep.subr.bf16.mxu0 0
    %190 = vmatpush2.bf16.msra.mxu0 0
    %191 = vmatprep.subr.bf16.mxu0 0
    %192 = vmatpush2.bf16.msra.mxu0 0
    %193 = vmatprep.subr.bf16.mxu0 0
    %194 = vmatpush2.bf16.msra.mxu0 0
    %195 = vmatprep.subr.bf16.mxu0 0
    %196 = vmatpush2.bf16.msra.mxu0 0
    %197 = vmatprep.subr.bf16.mxu0 0
    %198 = vmatpush2.bf16.msra.mxu0 0
    %199 = vmatprep.subr.bf16.mxu0 0
    %200 = vmatpush2.bf16.msra.mxu0 0
    %201 = vmatprep.subr.bf16.mxu0 0
    %202 = vmatpush2.bf16.msra.mxu0 0
    %203 = vmatprep.mubr.bf16.mxu0 0
    %204 = vmatmul.mubr.bf16.gmra.mxu0 %v169
    %v205 = vpop.f32.mrf.mxu0
    %v206 = vadd.f32 0.0, %v205
    %v207 = vpop.f32.mrf.mxu0
    %v208 = vpop.f32.mrf.mxu0
    %v209 = vpop.f32.mrf.mxu0
    %210 = vdwg.mxu0
    %v211 = vadd.f32 %v116, %v206
    %v212 = vxor.u32 %v211, 2147483648
    %v213 = vmul.f32 %v212, 1.442695
    %v214 = vpow.pop %v213
    %v215 = vadd.f32 %v214, 1.0
    %v216 = vrcp.pop %v215
    %v217 = vmul.f32 1.0, %v216
    %v218 = vtanh.pop %v211
    %v219 = vsel %vm154, %v218, %v217
    %v220 = vmul.f32 %v219, 0.0
    %222 = vrot.lane.b32.xlu0 %v219, 64
    %v223 = vpop.permute.xlu0 %222
    %v225 = vmul.f32 %v219, %v223
    %227 = vrot.lane.b32.xlu0 %v225, 32
    %v228 = vpop.permute.xlu0 %227
    %v230 = vadd.f32 %v220, %v228
    %v231 = vtanh.pop %v230
    %233 = vrot.lane.b32.xlu0 %v231, 64
    %v234 = vpop.permute.xlu0 %233
    %v236 = vmul.f32 %v219, %v234
    %v237 = vpack.c.bf16 %v236, %v236
    %239 = vrot.lane.b32.xlu0 %v237, 32
    %v240 = vpop.permute.xlu0 %239
    %v242 = vsel %vm167, %v240, 0
    %244 = vmatprep.subr.bf16.mxu0 0
    %245 = vmatpush1.bf16.msra.mxu0 0
    %246 = vmatprep.subr.bf16.mxu0 0
    %247 = vmatpush1.bf16.msra.mxu0 0
    %248 = vmatprep.subr.bf16.mxu0 0
    %249 = vmatpush1.bf16.msra.mxu0 0
    %250 = vmatprep.subr.bf16.mxu0 0
    %251 = vmatpush1.bf16.msra.mxu0 0
    %252 = vmatprep.subr.bf16.mxu0 0
    %253 = vmatpush1.bf16.msra.mxu0 0
    %254 = vmatprep.subr.bf16.mxu0 0
    %255 = vmatpush1.bf16.msra.mxu0 0
    %256 = vmatprep.subr.bf16.mxu0 0
    %257 = vmatpush1.bf16.msra.mxu0 %v164
    %258 = vmatprep.subr.bf16.mxu0 0
    %259 = vmatpush1.bf16.msra.mxu0 %v163
    %260 = vmatprep.subr.bf16.mxu0 0
    %261 = vmatpush2.bf16.msra.mxu0 0
    %262 = vmatprep.subr.bf16.mxu0 0
    %263 = vmatpush2.bf16.msra.mxu0 0
    %264 = vmatprep.subr.bf16.mxu0 0
    %265 = vmatpush2.bf16.msra.mxu0 0
    %266 = vmatprep.subr.bf16.mxu0 0
    %267 = vmatpush2.bf16.msra.mxu0 0
    %268 = vmatprep.subr.bf16.mxu0 0
    %269 = vmatpush2.bf16.msra.mxu0 0
    %270 = vmatprep.subr.bf16.mxu0 0
    %271 = vmatpush2.bf16.msra.mxu0 0
    %272 = vmatprep.subr.bf16.mxu0 0
    %273 = vmatpush2.bf16.msra.mxu0 0
    %274 = vmatprep.subr.bf16.mxu0 0
    %275 = vmatpush2.bf16.msra.mxu0 0
    %276 = vmatprep.mubr.bf16.mxu0 0
    %277 = vmatmul.mubr.bf16.gmra.mxu0 %v242
    %v278 = vpop.f32.mrf.mxu0
    %v279 = vadd.f32 0.0, %v278
    %v280 = vpop.f32.mrf.mxu0
    %v281 = vpop.f32.mrf.mxu0
    %v282 = vpop.f32.mrf.mxu0
    %283 = vdwg.mxu0
    %v284 = vadd.f32 %v119, %v279
    %v285 = vxor.u32 %v284, 2147483648
    %v286 = vmul.f32 %v285, 1.442695
    %v287 = vpow.pop %v286
    %v288 = vadd.f32 %v287, 1.0
    %v289 = vrcp.pop %v288
    %v290 = vmul.f32 1.0, %v289
    %v291 = vtanh.pop %v284
    %v292 = vsel %vm154, %v291, %v290
    %v293 = vmul.f32 %v292, %v230
    %295 = vrot.lane.b32.xlu0 %v292, 64
    %v296 = vpop.permute.xlu0 %295
    %v298 = vmul.f32 %v292, %v296
    %300 = vrot.lane.b32.xlu0 %v298, 32
    %v301 = vpop.permute.xlu0 %300
    %v303 = vadd.f32 %v293, %v301
    %v304 = vtanh.pop %v303
    %306 = vrot.lane.b32.xlu0 %v304, 64
    %v307 = vpop.permute.xlu0 %306
    %v309 = vmul.f32 %v292, %v307
    %v310 = vpack.c.bf16 %v309, %v309
    %312 = vrot.lane.b32.xlu0 %v310, 32
    %v313 = vpop.permute.xlu0 %312
    %v315 = vsel %vm167, %v313, 0
    %317 = vmatprep.subr.bf16.mxu0 0
    %318 = vmatpush1.bf16.msra.mxu0 0
    %319 = vmatprep.subr.bf16.mxu0 0
    %320 = vmatpush1.bf16.msra.mxu0 0
    %321 = vmatprep.subr.bf16.mxu0 0
    %322 = vmatpush1.bf16.msra.mxu0 0
    %323 = vmatprep.subr.bf16.mxu0 0
    %324 = vmatpush1.bf16.msra.mxu0 0
    %325 = vmatprep.subr.bf16.mxu0 0
    %326 = vmatpush1.bf16.msra.mxu0 0
    %327 = vmatprep.subr.bf16.mxu0 0
    %328 = vmatpush1.bf16.msra.mxu0 0
    %329 = vmatprep.subr.bf16.mxu0 0
    %330 = vmatpush1.bf16.msra.mxu0 %v164
    %331 = vmatprep.subr.bf16.mxu0 0
    %332 = vmatpush1.bf16.msra.mxu0 %v163
    %333 = vmatprep.subr.bf16.mxu0 0
    %334 = vmatpush2.bf16.msra.mxu0 0
    %335 = vmatprep.subr.bf16.mxu0 0
    %336 = vmatpush2.bf16.msra.mxu0 0
    %337 = vmatprep.subr.bf16.mxu0 0
    %338 = vmatpush2.bf16.msra.mxu0 0
    %339 = vmatprep.subr.bf16.mxu0 0
    %340 = vmatpush2.bf16.msra.mxu0 0
    %341 = vmatprep.subr.bf16.mxu0 0
    %342 = vmatpush2.bf16.msra.mxu0 0
    %343 = vmatprep.subr.bf16.mxu0 0
    %344 = vmatpush2.bf16.msra.mxu0 0
    %345 = vmatprep.subr.bf16.mxu0 0
    %346 = vmatpush2.bf16.msra.mxu0 0
    %347 = vmatprep.subr.bf16.mxu0 0
    %348 = vmatpush2.bf16.msra.mxu0 0
    %349 = vmatprep.mubr.bf16.mxu0 0
    %350 = vmatmul.mubr.bf16.gmra.mxu0 %v315
    %v351 = vpop.f32.mrf.mxu0
    %v352 = vadd.f32 0.0, %v351
    %v353 = vpop.f32.mrf.mxu0
    %v354 = vpop.f32.mrf.mxu0
    %v355 = vpop.f32.mrf.mxu0
    %356 = vdwg.mxu0
    %v357 = vadd.f32 %v124, %v352
    %v358 = vxor.u32 %v357, 2147483648
    %v359 = vmul.f32 %v358, 1.442695
    %v360 = vpow.pop %v359
    %v361 = vadd.f32 %v360, 1.0
    %v362 = vrcp.pop %v361
    %v363 = vmul.f32 1.0, %v362
    %v364 = vtanh.pop %v357
    %v365 = vsel %vm154, %v364, %v363
    %v366 = vmul.f32 %v365, %v303
    %368 = vrot.lane.b32.xlu0 %v365, 64
    %v369 = vpop.permute.xlu0 %368
    %v371 = vmul.f32 %v365, %v369
    %373 = vrot.lane.b32.xlu0 %v371, 32
    %v374 = vpop.permute.xlu0 %373
    %v376 = vadd.f32 %v366, %v374
    %v377 = vtanh.pop %v376
    %379 = vrot.lane.b32.xlu0 %v377, 64
    %v380 = vpop.permute.xlu0 %379
    %v382 = vmul.f32 %v365, %v380
    %v383 = vpack.c.bf16 %v382, %v382
    %385 = vrot.lane.b32.xlu0 %v383, 32
    %v386 = vpop.permute.xlu0 %385
    %v388 = vsel %vm167, %v386, 0
    %390 = vmatprep.subr.bf16.mxu0 0
    %391 = vmatpush1.bf16.msra.mxu0 0
    %392 = vmatprep.subr.bf16.mxu0 0
    %393 = vmatpush1.bf16.msra.mxu0 0
    %394 = vmatprep.subr.bf16.mxu0 0
    %395 = vmatpush1.bf16.msra.mxu0 0
    %396 = vmatprep.subr.bf16.mxu0 0
    %397 = vmatpush1.bf16.msra.mxu0 0
    %398 = vmatprep.subr.bf16.mxu0 0
    %399 = vmatpush1.bf16.msra.mxu0 0
    %400 = vmatprep.subr.bf16.mxu0 0
    %401 = vmatpush1.bf16.msra.mxu0 0
    %402 = vmatprep.subr.bf16.mxu0 0
    %403 = vmatpush1.bf16.msra.mxu0 %v164
    %404 = vmatprep.subr.bf16.mxu0 0
    %405 = vmatpush1.bf16.msra.mxu0 %v163
    %406 = vmatprep.subr.bf16.mxu0 0
    %407 = vmatpush2.bf16.msra.mxu0 0
    %408 = vmatprep.subr.bf16.mxu0 0
    %409 = vmatpush2.bf16.msra.mxu0 0
    %410 = vmatprep.subr.bf16.mxu0 0
    %411 = vmatpush2.bf16.msra.mxu0 0
    %412 = vmatprep.subr.bf16.mxu0 0
    %413 = vmatpush2.bf16.msra.mxu0 0
    %414 = vmatprep.subr.bf16.mxu0 0
    %415 = vmatpush2.bf16.msra.mxu0 0
    %416 = vmatprep.subr.bf16.mxu0 0
    %417 = vmatpush2.bf16.msra.mxu0 0
    %418 = vmatprep.subr.bf16.mxu0 0
    %419 = vmatpush2.bf16.msra.mxu0 0
    %420 = vmatprep.subr.bf16.mxu0 0
    %421 = vmatpush2.bf16.msra.mxu0 0
    %422 = vmatprep.mubr.bf16.mxu0 0
    %423 = vmatmul.mubr.bf16.gmra.mxu0 %v388
    %v424 = vpop.f32.mrf.mxu0
    %v425 = vadd.f32 0.0, %v424
    %v426 = vpop.f32.mrf.mxu0
    %v427 = vpop.f32.mrf.mxu0
    %v428 = vpop.f32.mrf.mxu0
    %429 = vdwg.mxu0
    %v430 = vadd.f32 %v127, %v425
    %v431 = vxor.u32 %v430, 2147483648
    %v432 = vmul.f32 %v431, 1.442695
    %v433 = vpow.pop %v432
    %v434 = vadd.f32 %v433, 1.0
    %v435 = vrcp.pop %v434
    %v436 = vmul.f32 1.0, %v435
    %v437 = vtanh.pop %v430
    %v438 = vsel %vm154, %v437, %v436
    %v439 = vmul.f32 %v438, %v376
    %441 = vrot.lane.b32.xlu0 %v438, 64
    %v442 = vpop.permute.xlu0 %441
    %v444 = vmul.f32 %v438, %v442
    %446 = vrot.lane.b32.xlu0 %v444, 32
    %v447 = vpop.permute.xlu0 %446
    %v449 = vadd.f32 %v439, %v447
    %v450 = vtanh.pop %v449
    %452 = vrot.lane.b32.xlu0 %v450, 64
    %v453 = vpop.permute.xlu0 %452
    %v455 = vmul.f32 %v438, %v453
    %v456 = vpack.c.bf16 %v455, %v455
    %458 = vrot.lane.b32.xlu0 %v456, 32
    %v459 = vpop.permute.xlu0 %458
    %v461 = vsel %vm167, %v459, 0
    %463 = vmatprep.subr.bf16.mxu0 0
    %464 = vmatpush1.bf16.msra.mxu0 0
    %465 = vmatprep.subr.bf16.mxu0 0
    %466 = vmatpush1.bf16.msra.mxu0 0
    %467 = vmatprep.subr.bf16.mxu0 0
    %468 = vmatpush1.bf16.msra.mxu0 0
    %469 = vmatprep.subr.bf16.mxu0 0
    %470 = vmatpush1.bf16.msra.mxu0 0
    %471 = vmatprep.subr.bf16.mxu0 0
    %472 = vmatpush1.bf16.msra.mxu0 0
    %473 = vmatprep.subr.bf16.mxu0 0
    %474 = vmatpush1.bf16.msra.mxu0 0
    %475 = vmatprep.subr.bf16.mxu0 0
    %476 = vmatpush1.bf16.msra.mxu0 %v164
    %477 = vmatprep.subr.bf16.mxu0 0
    %478 = vmatpush1.bf16.msra.mxu0 %v163
    %479 = vmatprep.subr.bf16.mxu0 0
    %480 = vmatpush2.bf16.msra.mxu0 0
    %481 = vmatprep.subr.bf16.mxu0 0
    %482 = vmatpush2.bf16.msra.mxu0 0
    %483 = vmatprep.subr.bf16.mxu0 0
    %484 = vmatpush2.bf16.msra.mxu0 0
    %485 = vmatprep.subr.bf16.mxu0 0
    %486 = vmatpush2.bf16.msra.mxu0 0
    %487 = vmatprep.subr.bf16.mxu0 0
    %488 = vmatpush2.bf16.msra.mxu0 0
    %489 = vmatprep.subr.bf16.mxu0 0
    %490 = vmatpush2.bf16.msra.mxu0 0
    %491 = vmatprep.subr.bf16.mxu0 0
    %492 = vmatpush2.bf16.msra.mxu0 0
    %493 = vmatprep.subr.bf16.mxu0 0
    %494 = vmatpush2.bf16.msra.mxu0 0
    %495 = vmatprep.mubr.bf16.mxu0 0
    %496 = vmatmul.mubr.bf16.gmra.mxu0 %v461
    %v497 = vpop.f32.mrf.mxu0
    %v498 = vadd.f32 0.0, %v497
    %v499 = vpop.f32.mrf.mxu0
    %v500 = vpop.f32.mrf.mxu0
    %v501 = vpop.f32.mrf.mxu0
    %502 = vdwg.mxu0
    %v503 = vadd.f32 %v132, %v498
    %v504 = vxor.u32 %v503, 2147483648
    %v505 = vmul.f32 %v504, 1.442695
    %v506 = vpow.pop %v505
    %v507 = vadd.f32 %v506, 1.0
    %v508 = vrcp.pop %v507
    %v509 = vmul.f32 1.0, %v508
    %v510 = vtanh.pop %v503
    %v511 = vsel %vm154, %v510, %v509
    %v512 = vmul.f32 %v511, %v449
    %514 = vrot.lane.b32.xlu0 %v511, 64
    %v515 = vpop.permute.xlu0 %514
    %v517 = vmul.f32 %v511, %v515
    %519 = vrot.lane.b32.xlu0 %v517, 32
    %v520 = vpop.permute.xlu0 %519
    %v522 = vadd.f32 %v512, %v520
    %v523 = vtanh.pop %v522
    %525 = vrot.lane.b32.xlu0 %v523, 64
    %v526 = vpop.permute.xlu0 %525
    %v528 = vmul.f32 %v511, %v526
    %v529 = vpack.c.bf16 %v528, %v528
    %531 = vrot.lane.b32.xlu0 %v529, 32
    %v532 = vpop.permute.xlu0 %531
    %v534 = vsel %vm167, %v532, 0
    %536 = vmatprep.subr.bf16.mxu0 0
    %537 = vmatpush1.bf16.msra.mxu0 0
    %538 = vmatprep.subr.bf16.mxu0 0
    %539 = vmatpush1.bf16.msra.mxu0 0
    %540 = vmatprep.subr.bf16.mxu0 0
    %541 = vmatpush1.bf16.msra.mxu0 0
    %542 = vmatprep.subr.bf16.mxu0 0
    %543 = vmatpush1.bf16.msra.mxu0 0
    %544 = vmatprep.subr.bf16.mxu0 0
    %545 = vmatpush1.bf16.msra.mxu0 0
    %546 = vmatprep.subr.bf16.mxu0 0
    %547 = vmatpush1.bf16.msra.mxu0 0
    %548 = vmatprep.subr.bf16.mxu0 0
    %549 = vmatpush1.bf16.msra.mxu0 %v164
    %550 = vmatprep.subr.bf16.mxu0 0
    %551 = vmatpush1.bf16.msra.mxu0 %v163
    %552 = vmatprep.subr.bf16.mxu0 0
    %553 = vmatpush2.bf16.msra.mxu0 0
    %554 = vmatprep.subr.bf16.mxu0 0
    %555 = vmatpush2.bf16.msra.mxu0 0
    %556 = vmatprep.subr.bf16.mxu0 0
    %557 = vmatpush2.bf16.msra.mxu0 0
    %558 = vmatprep.subr.bf16.mxu0 0
    %559 = vmatpush2.bf16.msra.mxu0 0
    %560 = vmatprep.subr.bf16.mxu0 0
    %561 = vmatpush2.bf16.msra.mxu0 0
    %562 = vmatprep.subr.bf16.mxu0 0
    %563 = vmatpush2.bf16.msra.mxu0 0
    %564 = vmatprep.subr.bf16.mxu0 0
    %565 = vmatpush2.bf16.msra.mxu0 0
    %566 = vmatprep.subr.bf16.mxu0 0
    %567 = vmatpush2.bf16.msra.mxu0 0
    %568 = vmatprep.mubr.bf16.mxu0 0
    %569 = vmatmul.mubr.bf16.gmra.mxu0 %v534
    %v570 = vpop.f32.mrf.mxu0
    %v571 = vadd.f32 0.0, %v570
    %v572 = vpop.f32.mrf.mxu0
    %v573 = vpop.f32.mrf.mxu0
    %v574 = vpop.f32.mrf.mxu0
    %575 = vdwg.mxu0
    %v576 = vadd.f32 %v135, %v571
    %v577 = vxor.u32 %v576, 2147483648
    %v578 = vmul.f32 %v577, 1.442695
    %v579 = vpow.pop %v578
    %v580 = vadd.f32 %v579, 1.0
    %v581 = vrcp.pop %v580
    %v582 = vmul.f32 1.0, %v581
    %v583 = vtanh.pop %v576
    %v584 = vsel %vm154, %v583, %v582
    %v585 = vmul.f32 %v584, %v522
    %587 = vrot.lane.b32.xlu0 %v584, 64
    %v588 = vpop.permute.xlu0 %587
    %v590 = vmul.f32 %v584, %v588
    %592 = vrot.lane.b32.xlu0 %v590, 32
    %v593 = vpop.permute.xlu0 %592
    %v595 = vadd.f32 %v585, %v593
    %v596 = vtanh.pop %v595
    %598 = vrot.lane.b32.xlu0 %v596, 64
    %v599 = vpop.permute.xlu0 %598
    %v601 = vmul.f32 %v584, %v599
    %v602 = vpack.c.bf16 %v601, %v601
    %604 = vrot.lane.b32.xlu0 %v602, 32
    %v605 = vpop.permute.xlu0 %604
    %v607 = vsel %vm167, %v605, 0
    %609 = vmatprep.subr.bf16.mxu0 0
    %610 = vmatpush1.bf16.msra.mxu0 0
    %611 = vmatprep.subr.bf16.mxu0 0
    %612 = vmatpush1.bf16.msra.mxu0 0
    %613 = vmatprep.subr.bf16.mxu0 0
    %614 = vmatpush1.bf16.msra.mxu0 0
    %615 = vmatprep.subr.bf16.mxu0 0
    %616 = vmatpush1.bf16.msra.mxu0 0
    %617 = vmatprep.subr.bf16.mxu0 0
    %618 = vmatpush1.bf16.msra.mxu0 0
    %619 = vmatprep.subr.bf16.mxu0 0
    %620 = vmatpush1.bf16.msra.mxu0 0
    %621 = vmatprep.subr.bf16.mxu0 0
    %622 = vmatpush1.bf16.msra.mxu0 %v164
    %623 = vmatprep.subr.bf16.mxu0 0
    %624 = vmatpush1.bf16.msra.mxu0 %v163
    %625 = vmatprep.subr.bf16.mxu0 0
    %626 = vmatpush2.bf16.msra.mxu0 0
    %627 = vmatprep.subr.bf16.mxu0 0
    %628 = vmatpush2.bf16.msra.mxu0 0
    %629 = vmatprep.subr.bf16.mxu0 0
    %630 = vmatpush2.bf16.msra.mxu0 0
    %631 = vmatprep.subr.bf16.mxu0 0
    %632 = vmatpush2.bf16.msra.mxu0 0
    %633 = vmatprep.subr.bf16.mxu0 0
    %634 = vmatpush2.bf16.msra.mxu0 0
    %635 = vmatprep.subr.bf16.mxu0 0
    %636 = vmatpush2.bf16.msra.mxu0 0
    %637 = vmatprep.subr.bf16.mxu0 0
    %638 = vmatpush2.bf16.msra.mxu0 0
    %639 = vmatprep.subr.bf16.mxu0 0
    %640 = vmatpush2.bf16.msra.mxu0 0
    %641 = vmatprep.mubr.bf16.mxu0 0
    %642 = vmatmul.mubr.bf16.gmra.mxu0 %v607
    %v643 = vpop.f32.mrf.mxu0
    %v644 = vadd.f32 0.0, %v643
    %v645 = vpop.f32.mrf.mxu0
    %v646 = vpop.f32.mrf.mxu0
    %v647 = vpop.f32.mrf.mxu0
    %648 = vdwg.mxu0
    %v649 = vadd.f32 %v140, %v644
    %v650 = vxor.u32 %v649, 2147483648
    %v651 = vmul.f32 %v650, 1.442695
    %v652 = vpow.pop %v651
    %v653 = vadd.f32 %v652, 1.0
    %v654 = vrcp.pop %v653
    %v655 = vmul.f32 1.0, %v654
    %v656 = vtanh.pop %v649
    %v657 = vsel %vm154, %v656, %v655
    %v658 = vmul.f32 %v657, %v595
    %660 = vrot.lane.b32.xlu0 %v657, 64
    %v661 = vpop.permute.xlu0 %660
    %v663 = vmul.f32 %v657, %v661
    %665 = vrot.lane.b32.xlu0 %v663, 32
    %v666 = vpop.permute.xlu0 %665
    %v668 = vadd.f32 %v658, %v666
    %v669 = vtanh.pop %v668
    %671 = vrot.lane.b32.xlu0 %v669, 64
    %v672 = vpop.permute.xlu0 %671
    %v674 = vmul.f32 %v657, %v672
    %v675 = vpack.c.bf16 %v674, %v674
    %677 = vrot.lane.b32.xlu0 %v675, 32
    %v678 = vpop.permute.xlu0 %677
    %v680 = vsel %vm167, %v678, 0
    %682 = vmatprep.subr.bf16.mxu0 0
    %683 = vmatpush1.bf16.msra.mxu0 0
    %684 = vmatprep.subr.bf16.mxu0 0
    %685 = vmatpush1.bf16.msra.mxu0 0
    %686 = vmatprep.subr.bf16.mxu0 0
    %687 = vmatpush1.bf16.msra.mxu0 0
    %688 = vmatprep.subr.bf16.mxu0 0
    %689 = vmatpush1.bf16.msra.mxu0 0
    %690 = vmatprep.subr.bf16.mxu0 0
    %691 = vmatpush1.bf16.msra.mxu0 0
    %692 = vmatprep.subr.bf16.mxu0 0
    %693 = vmatpush1.bf16.msra.mxu0 0
    %694 = vmatprep.subr.bf16.mxu0 0
    %695 = vmatpush1.bf16.msra.mxu0 %v164
    %696 = vmatprep.subr.bf16.mxu0 0
    %697 = vmatpush1.bf16.msra.mxu0 %v163
    %698 = vmatprep.subr.bf16.mxu0 0
    %699 = vmatpush2.bf16.msra.mxu0 0
    %700 = vmatprep.subr.bf16.mxu0 0
    %701 = vmatpush2.bf16.msra.mxu0 0
    %702 = vmatprep.subr.bf16.mxu0 0
    %703 = vmatpush2.bf16.msra.mxu0 0
    %704 = vmatprep.subr.bf16.mxu0 0
    %705 = vmatpush2.bf16.msra.mxu0 0
    %706 = vmatprep.subr.bf16.mxu0 0
    %707 = vmatpush2.bf16.msra.mxu0 0
    %708 = vmatprep.subr.bf16.mxu0 0
    %709 = vmatpush2.bf16.msra.mxu0 0
    %710 = vmatprep.subr.bf16.mxu0 0
    %711 = vmatpush2.bf16.msra.mxu0 0
    %712 = vmatprep.subr.bf16.mxu0 0
    %713 = vmatpush2.bf16.msra.mxu0 0
    %714 = vmatprep.mubr.bf16.mxu0 0
    %715 = vmatmul.mubr.bf16.gmra.mxu0 %v680
    %v716 = vpop.f32.mrf.mxu0
    %v717 = vadd.f32 0.0, %v716
    %v718 = vpop.f32.mrf.mxu0
    %v719 = vpop.f32.mrf.mxu0
    %v720 = vpop.f32.mrf.mxu0
    %721 = vdwg.mxu0
    %v722 = vadd.f32 %v143, %v717
    %v723 = vxor.u32 %v722, 2147483648
    %v724 = vmul.f32 %v723, 1.442695
    %v725 = vpow.pop %v724
    %v726 = vadd.f32 %v725, 1.0
    %v727 = vrcp.pop %v726
    %v728 = vmul.f32 1.0, %v727
    %v729 = vtanh.pop %v722
    %v730 = vsel %vm154, %v729, %v728
    %v731 = vmul.f32 %v730, %v668
    %733 = vrot.lane.b32.xlu0 %v730, 64
    %v734 = vpop.permute.xlu0 %733
    %v736 = vmul.f32 %v730, %v734
    %738 = vrot.lane.b32.xlu0 %v736, 32
    %v739 = vpop.permute.xlu0 %738
    %v741 = vadd.f32 %v731, %v739
    %v742 = vtanh.pop %v741
    %744 = vrot.lane.b32.xlu0 %v742, 64
    %v745 = vpop.permute.xlu0 %744
    %v747 = vmul.f32 %v730, %v745
    %v748 = vpack.c.bf16 %v747, %v747
    %v749 = vld [vmem:[%s4] sm:$0xf]
    %v750 = vld [vmem:[%s4 + $0x4] sm:$0xf]
    %v751 = vld [vmem:[%s4 + $0x8] sm:$0xf]
    %v752 = vld [vmem:[%s4 + $0xc] sm:$0xf]
    %v753 = vld [vmem:[%s5] sm:$0x1]
    %v755 = vlaneseq
    %v756 = vshrl.u32 %v755, 7
    %v757 = vsub.s32 0, %v756
    %v758 = vrot.slane %v753, %v757
    %761 = vrot.lane.b32.xlu0 %v748, 32
    %v762 = vpop.permute.xlu0 %761
    %v767 = vunpack.c.l.b16 %v749
    %v768 = vunpack.c.l.b16 %v750
    %v769 = vunpack.c.l.b16 %v751
    %v770 = vunpack.c.l.b16 %v752
    %v771 = vpack.c.b16 %v768, %v767
    %v772 = vpack.c.b16 %v770, %v769
    %v776 = vsel %vm167, %v762, 0
    %778 = vmatprep.subr.bf16.mxu0 0
    %779 = vmatpush1.bf16.msra.mxu0 0
    %780 = vmatprep.subr.bf16.mxu0 0
    %781 = vmatpush1.bf16.msra.mxu0 0
    %782 = vmatprep.subr.bf16.mxu0 0
    %783 = vmatpush1.bf16.msra.mxu0 0
    %784 = vmatprep.subr.bf16.mxu0 0
    %785 = vmatpush1.bf16.msra.mxu0 0
    %786 = vmatprep.subr.bf16.mxu0 0
    %787 = vmatpush1.bf16.msra.mxu0 0
    %788 = vmatprep.subr.bf16.mxu0 0
    %789 = vmatpush1.bf16.msra.mxu0 0
    %790 = vmatprep.subr.bf16.mxu0 0
    %791 = vmatpush1.bf16.msra.mxu0 %v772
    %792 = vmatprep.subr.bf16.mxu0 0
    %793 = vmatpush1.bf16.msra.mxu0 %v771
    %794 = vmatprep.subr.bf16.mxu0 0
    %795 = vmatpush2.bf16.msra.mxu0 0
    %796 = vmatprep.subr.bf16.mxu0 0
    %797 = vmatpush2.bf16.msra.mxu0 0
    %798 = vmatprep.subr.bf16.mxu0 0
    %799 = vmatpush2.bf16.msra.mxu0 0
    %800 = vmatprep.subr.bf16.mxu0 0
    %801 = vmatpush2.bf16.msra.mxu0 0
    %802 = vmatprep.subr.bf16.mxu0 0
    %803 = vmatpush2.bf16.msra.mxu0 0
    %804 = vmatprep.subr.bf16.mxu0 0
    %805 = vmatpush2.bf16.msra.mxu0 0
    %806 = vmatprep.subr.bf16.mxu0 0
    %807 = vmatpush2.bf16.msra.mxu0 0
    %808 = vmatprep.subr.bf16.mxu0 0
    %809 = vmatpush2.bf16.msra.mxu0 0
    %810 = vmatprep.mubr.bf16.mxu0 0
    %811 = vmatmul.mubr.bf16.gmra.mxu0 %v776
    %v812 = vpop.f32.mrf.mxu0
    %v813 = vadd.f32 %v758, %v812
    %v814 = vpop.f32.mrf.mxu0
    %v815 = vpop.f32.mrf.mxu0
    %v816 = vpop.f32.mrf.mxu0
    %817 = vdwg.mxu0
    %818 = vst [vmem:[#allocation2] sm:$0xff] %v813
    // Predicated region
    $region26: #{tpu_custom_call.1} parent=1 // pred_check
      _
    $region27: #{tpu_custom_call.1} parent=1 // pred_check_branch
      %820 = sbr.rel (0) target = $region29
    $region28: #{tpu_custom_call.1} parent=1 // pred_region
      %s822 = ssub.s32 128, 128
      %823 = vsyncadd [#allocation3], %s822
      %s825 = sshll.u32 [#allocation2], 4
      %s826 = int_to_ptr.vmem [resolvable:$true] %s825
      %828 = dma.vmem_to_hbm [thread:$0]  %s826, 128, %s6, [#allocation3]
    $region29: #{tpu_custom_call.1} parent=1 // pred_fallthru
      _
    // Predicated region
    $region30: #{tpu_custom_call.1} parent=1 // pred_check
      _
    $region31: #{tpu_custom_call.1} parent=1 // pred_check_branch
      %830 = sbr.rel (0) target = $region33
    $region32: #{tpu_custom_call.1} parent=1 // pred_region
      %831 = dma.done [#allocation3], 128
    $region33: #{tpu_custom_call.1} parent=1 // pred_fallthru
      _
    %832 = vsyncpa [#allocation3], 1

</llo_original>
